<compile_context>
chip_gen: v6e
topology: v6e:2x2x1
jax: 0.10.0
libtpu: 0.0.40
codegen_flags: <defaults>
</compile_context>

<pallas_src>
import functools

import jax
import jax.numpy as jnp
from jax import lax
from jax.experimental import pallas as pl
from jax.experimental.pallas import tpu as pltpu

CLAMP_LOGVARMIN = -8.0
H_DIM = 32
LANE = 128
N_LAYERS = 8


def _encoder_kernel(z_dim, n_rows, n_padded, data_ref, w_ref, b_ref, out_ref):
    """data_ref: (n_padded, 128), w_ref: (8, 128, 128), b_ref: (8, 128),
    out_ref: (8, 128). Result lives in out_ref[0, :2*z_dim]."""
    f32 = jnp.float32

    def linear(x, layer):
        # w_ref[layer] -> (128, 128); b_ref[layer:layer+1, :] -> (1, 128)
        return (jnp.dot(x, w_ref[layer], preferred_element_type=f32)
                + b_ref[layer:layer + 1, :])

    def relu(x):
        return jnp.maximum(x, 0.0)

    # ---- net1 layers 0..2 over all N transitions: (Np, 128) -> (Np, 128) ----
    x = data_ref[...]
    h = relu(linear(x, 0))
    h = relu(linear(h, 1))
    h = relu(linear(h, 2))

    # Mask zero-padded rows (they picked up bias terms), then fold the row-sum
    # through net1's final linear:  sum(h) @ W3 + N * b3.
    if n_padded != n_rows:
        row = lax.broadcasted_iota(jnp.int32, h.shape, 0)
        h = jnp.where(row < n_rows, h, 0.0)
    hs = jnp.sum(h, axis=0, keepdims=True)                       # (1, 128)
    s = (jnp.dot(hs, w_ref[3], preferred_element_type=f32)
         + float(n_rows) * b_ref[3:4, :])                        # (1, 128)

    # ---- net2: (1, 128) -> (1, 128) ----
    h = relu(linear(s, 4))
    h = relu(linear(h, 5))
    h = relu(linear(h, 6))
    mu_logvar = linear(h, 7)                                     # (1, 128)

    # ---- hstack([mu, clamp(logvar, min=-8)]) : clamp lanes >= z_dim ----
    col = lax.broadcasted_iota(jnp.int32, mu_logvar.shape, 1)
    clamped = jnp.maximum(mu_logvar, CLAMP_LOGVARMIN)
    res = jnp.where(col >= z_dim, clamped, mu_logvar)            # (1, 128)

    out_ref[...] = jnp.broadcast_to(res, out_ref.shape)          # lane-dense store


def pack_params(params):
    """Pack 8 (W, b) pairs into zero-padded blobs.

    params[2l]   : (fan_in, fan_out) weight (already (in, out) layout)
    params[2l+1] : (fan_out,) bias
    Returns w_blob (8, 128, 128), b_blob (8, 128), both f32.
    """
    w_blob = jnp.zeros((N_LAYERS, LANE, LANE), jnp.float32)
    b_blob = jnp.zeros((N_LAYERS, LANE), jnp.float32)
    for l in range(N_LAYERS):
        w = params[2 * l].astype(jnp.float32)
        b = params[2 * l + 1].reshape(-1).astype(jnp.float32)
        w_blob = w_blob.at[l, : w.shape[0], : w.shape[1]].set(w)
        b_blob = b_blob.at[l, : b.shape[0]].set(b)
    return w_blob, b_blob


def encoder_forward_batched(data, w_blob, b_blob, z_dim):
    """data: (B, N, in_dim) f32 -> (B, 2*z_dim) f32. Weights stay VMEM-resident
    across the batch grid."""
    B, N, in_dim = data.shape
    zz = 2 * z_dim
    n_padded = -(-N // 8) * 8

    # Pad transitions to a sublane multiple and features to the 128-lane width.
    data_p = jnp.zeros((B, n_padded, LANE), jnp.float32)
    data_p = data_p.at[:, :N, :in_dim].set(data.astype(jnp.float32))

    kernel = functools.partial(_encoder_kernel, z_dim, N, n_padded)

    # Rough (true-math) cost so XLA knows this call is tiny / latency-bound.
    flops = 2 * B * (N * (in_dim * H_DIM + 2 * H_DIM * H_DIM)
                     + H_DIM * zz + zz * H_DIM + 2 * H_DIM * H_DIM + H_DIM * zz)
    bytes_accessed = (w_blob.size + b_blob.size) * 4 + data_p.size * 4 + B * 8 * LANE * 4

    out = pl.pallas_call(
        kernel,
        out_shape=jax.ShapeDtypeStruct((B, 8, LANE), jnp.float32),
        grid_spec=pltpu.PrefetchScalarGridSpec(
            num_scalar_prefetch=0,
            grid=(B,),
            in_specs=[
                pl.BlockSpec((None, n_padded, LANE), lambda b: (b, 0, 0)),
                pl.BlockSpec((N_LAYERS, LANE, LANE), lambda b: (0, 0, 0)),
                pl.BlockSpec((N_LAYERS, LANE), lambda b: (0, 0)),
            ],
            out_specs=pl.BlockSpec((None, 8, LANE), lambda b: (b, 0, 0)),
        ),
        compiler_params=pltpu.CompilerParams(
            dimension_semantics=("parallel",)),
        cost_estimate=pl.CostEstimate(
            flops=flops, transcendentals=0, bytes_accessed=bytes_accessed),
    )(data_p, w_blob, b_blob)

    return out[:, 0, :zz]


def encoder_forward(data, w_blob, b_blob, z_dim):
    """Single-call forward matching the PyTorch module: data (N, in_dim) -> (2*z_dim,)."""
    return encoder_forward_batched(data[None], w_blob, b_blob, z_dim)[0]


def init_params(key, s_dim, a_dim, z_dim):
    """Deterministic PyTorch-style init: U(-1/sqrt(fan_in), 1/sqrt(fan_in)).
    Weights stored as (in_features, out_features)."""
    in_dim = 2 * s_dim + a_dim
    zz = 2 * z_dim
    layer_dims = [
        (in_dim, H_DIM), (H_DIM, H_DIM), (H_DIM, H_DIM), (H_DIM, zz),   # net1
        (zz, H_DIM), (H_DIM, H_DIM), (H_DIM, H_DIM), (H_DIM, zz),       # net2
    ]
    params = []
    for (fan_in, fan_out) in layer_dims:
        key, kw, kb = jax.random.split(key, 3)
        bound = 1.0 / jnp.sqrt(fan_in)
        w = jax.random.uniform(kw, (fan_in, fan_out), jnp.float32, -bound, bound)
        b = jax.random.uniform(kb, (fan_out,), jnp.float32, -bound, bound)
        params += [w, b]
    return params


def encoder_reference(data, params, z_dim):
    """Pure-JAX reference mirroring the PyTorch forward, for validation."""
    def mlp(x, p):
        for i in range(0, 8, 2):
            x = x @ p[i] + p[i + 1]
            if i < 6:
                x = jnp.maximum(x, 0.0)
        return x

    x = mlp(data, params[:8])
    mu_logvar = mlp(x.sum(0), params[8:])
    logvar = jnp.maximum(mu_logvar[z_dim:], CLAMP_LOGVARMIN)
    return jnp.concatenate([mu_logvar[:z_dim], logvar])


if __name__ == "__main__":
    s_dim, a_dim, z_dim = 6, 4, 5
    N, B = 8, 4
    in_dim = 2 * s_dim + a_dim  # 16

    key = jax.random.PRNGKey(0)
    key, kd = jax.random.split(key)
    data_batch = jax.random.normal(kd, (B, N, in_dim), jnp.float32)
    params = init_params(key, s_dim, a_dim, z_dim)
    w_blob, b_blob = pack_params(params)

    # Batched path (grid over B, weights VMEM-resident).
    out_b = jax.block_until_ready(
        encoder_forward_batched(data_batch, w_blob, b_blob, z_dim))
    ref_b = jnp.stack(
        [encoder_reference(data_batch[b], params, z_dim) for b in range(B)])
    assert out_b.shape == (B, 2 * z_dim)
    assert jnp.allclose(out_b, ref_b, atol=1e-4, rtol=1e-4), (out_b, ref_b)

    # Single-call path matching the PyTorch module signature.
    out0 = jax.block_until_ready(
        encoder_forward(data_batch[0], w_blob, b_blob, z_dim))
    assert out0.shape == (2 * z_dim,)
    assert jnp.allclose(out0, ref_b[0], atol=1e-4, rtol=1e-4), (out0, ref_b[0])

    print("KERNEL_OK")
</pallas_src>

<mosaic_0001>
module attributes {stable_mosaic.version = 11 : i64} {
  func.func @_encoder_kernel(%arg0: i32, %arg1: memref<1x8x128xf32, #tpu.memory_space<vmem>>, %arg2: memref<8x128x128xf32, #tpu.memory_space<vmem>>, %arg3: memref<8x128xf32, #tpu.memory_space<vmem>>, %arg4: memref<1x8x128xf32, #tpu.memory_space<vmem>>) attributes {dimension_semantics = [#tpu.dimension_semantics<parallel>], iteration_bounds = array<i64: 4>, scalar_prefetch = 0 : i64, scratch_operands = 0 : i64, tpu.core_type = #tpu.core_type<tc>, window_params = [{transform_indices = @transform_0, window_bounds = array<i64: 1, 8, 128>}, {pipeline_mode = #tpu.pipeline_mode<synchronous>, transform_indices = @transform_1, window_bounds = array<i64: 8, 128, 128>}, {pipeline_mode = #tpu.pipeline_mode<synchronous>, transform_indices = @transform_2, window_bounds = array<i64: 8, 128>}, {transform_indices = @transform_3, window_bounds = array<i64: 1, 8, 128>}]} {
    %c0 = arith.constant 0 : index
    %c0_0 = arith.constant 0 : index
    %c0_1 = arith.constant 0 : index
    %0 = vector.load %arg1[%c0, %c0_0, %c0_1] : memref<1x8x128xf32, #tpu.memory_space<vmem>>, vector<1x8x128xf32>
    %1 = vector.shape_cast %0 : vector<1x8x128xf32> to vector<8x128xf32>
    %c0_2 = arith.constant 0 : index
    %c0_3 = arith.constant 0 : index
    %c0_4 = arith.constant 0 : index
    %2 = vector.load %arg2[%c0_2, %c0_3, %c0_4] : memref<8x128x128xf32, #tpu.memory_space<vmem>>, vector<1x128x128xf32>
    %3 = vector.shape_cast %2 : vector<1x128x128xf32> to vector<128x128xf32>
    %cst = arith.constant dense<0.000000e+00> : vector<8x128xf32>
    %4 = tpu.matmul %1, %3, %cst {dimension_numbers = #tpu.dot_dimension_numbers<[1], [0], [0], [1], [0, 0, 1, 1], [], []>} : vector<8x128xf32>, vector<128x128xf32>, vector<8x128xf32> -> vector<8x128xf32>
    %c0_5 = arith.constant 0 : index
    %c0_6 = arith.constant 0 : index
    %5 = vector.load %arg3[%c0_5, %c0_6] : memref<8x128xf32, #tpu.memory_space<vmem>>, vector<1x128xf32>
    %6 = vector.broadcast %5 : vector<1x128xf32> to vector<8x128xf32>
    %7 = arith.addf %4, %6 : vector<8x128xf32>
    %cst_7 = arith.constant 0.000000e+00 : f32
    %8 = vector.broadcast %cst_7 : f32 to vector<8x128xf32>
    %9 = arith.maximumf %7, %8 : vector<8x128xf32>
    %c1 = arith.constant 1 : index
    %c0_8 = arith.constant 0 : index
    %c0_9 = arith.constant 0 : index
    %10 = vector.load %arg2[%c1, %c0_8, %c0_9] : memref<8x128x128xf32, #tpu.memory_space<vmem>>, vector<1x128x128xf32>
    %11 = vector.shape_cast %10 : vector<1x128x128xf32> to vector<128x128xf32>
    %cst_10 = arith.constant dense<0.000000e+00> : vector<8x128xf32>
    %12 = tpu.matmul %9, %11, %cst_10 {dimension_numbers = #tpu.dot_dimension_numbers<[1], [0], [0], [1], [0, 0, 1, 1], [], []>} : vector<8x128xf32>, vector<128x128xf32>, vector<8x128xf32> -> vector<8x128xf32>
    %c1_11 = arith.constant 1 : index
    %c0_12 = arith.constant 0 : index
    %13 = vector.load %arg3[%c1_11, %c0_12] : memref<8x128xf32, #tpu.memory_space<vmem>>, vector<1x128xf32>
    %14 = vector.broadcast %13 : vector<1x128xf32> to vector<8x128xf32>
    %15 = arith.addf %12, %14 : vector<8x128xf32>
    %cst_13 = arith.constant 0.000000e+00 : f32
    %16 = vector.broadcast %cst_13 : f32 to vector<8x128xf32>
    %17 = arith.maximumf %15, %16 : vector<8x128xf32>
    %c2 = arith.constant 2 : index
    %c0_14 = arith.constant 0 : index
    %c0_15 = arith.constant 0 : index
    %18 = vector.load %arg2[%c2, %c0_14, %c0_15] : memref<8x128x128xf32, #tpu.memory_space<vmem>>, vector<1x128x128xf32>
    %19 = vector.shape_cast %18 : vector<1x128x128xf32> to vector<128x128xf32>
    %cst_16 = arith.constant dense<0.000000e+00> : vector<8x128xf32>
    %20 = tpu.matmul %17, %19, %cst_16 {dimension_numbers = #tpu.dot_dimension_numbers<[1], [0], [0], [1], [0, 0, 1, 1], [], []>} : vector<8x128xf32>, vector<128x128xf32>, vector<8x128xf32> -> vector<8x128xf32>
    %c2_17 = arith.constant 2 : index
    %c0_18 = arith.constant 0 : index
    %21 = vector.load %arg3[%c2_17, %c0_18] : memref<8x128xf32, #tpu.memory_space<vmem>>, vector<1x128xf32>
    %22 = vector.broadcast %21 : vector<1x128xf32> to vector<8x128xf32>
    %23 = arith.addf %20, %22 : vector<8x128xf32>
    %cst_19 = arith.constant 0.000000e+00 : f32
    %24 = vector.broadcast %cst_19 : f32 to vector<8x128xf32>
    %25 = arith.maximumf %23, %24 : vector<8x128xf32>
    %cst_20 = arith.constant dense<0.000000e+00> : vector<128xf32>
    %26 = vector.multi_reduction <add>, %25, %cst_20 [0] : vector<8x128xf32> to vector<128xf32>
    %27 = vector.shape_cast %26 : vector<128xf32> to vector<1x128xf32>
    %c3 = arith.constant 3 : index
    %c0_21 = arith.constant 0 : index
    %c0_22 = arith.constant 0 : index
    %28 = vector.load %arg2[%c3, %c0_21, %c0_22] : memref<8x128x128xf32, #tpu.memory_space<vmem>>, vector<1x128x128xf32>
    %29 = vector.shape_cast %28 : vector<1x128x128xf32> to vector<128x128xf32>
    %cst_23 = arith.constant dense<0.000000e+00> : vector<1x128xf32>
    %30 = tpu.matmul %27, %29, %cst_23 {dimension_numbers = #tpu.dot_dimension_numbers<[1], [0], [0], [1], [0, 0, 1, 1], [], []>} : vector<1x128xf32>, vector<128x128xf32>, vector<1x128xf32> -> vector<1x128xf32>
    %c3_24 = arith.constant 3 : index
    %c0_25 = arith.constant 0 : index
    %31 = vector.load %arg3[%c3_24, %c0_25] : memref<8x128xf32, #tpu.memory_space<vmem>>, vector<1x128xf32>
    %cst_26 = arith.constant 8.000000e+00 : f32
    %32 = vector.broadcast %cst_26 : f32 to vector<1x128xf32>
    %33 = arith.mulf %32, %31 : vector<1x128xf32>
    %34 = arith.addf %30, %33 : vector<1x128xf32>
    %c4 = arith.constant 4 : index
    %c0_27 = arith.constant 0 : index
    %c0_28 = arith.constant 0 : index
    %35 = vector.load %arg2[%c4, %c0_27, %c0_28] : memref<8x128x128xf32, #tpu.memory_space<vmem>>, vector<1x128x128xf32>
    %36 = vector.shape_cast %35 : vector<1x128x128xf32> to vector<128x128xf32>
    %cst_29 = arith.constant dense<0.000000e+00> : vector<1x128xf32>
    %37 = tpu.matmul %34, %36, %cst_29 {dimension_numbers = #tpu.dot_dimension_numbers<[1], [0], [0], [1], [0, 0, 1, 1], [], []>} : vector<1x128xf32>, vector<128x128xf32>, vector<1x128xf32> -> vector<1x128xf32>
    %c4_30 = arith.constant 4 : index
    %c0_31 = arith.constant 0 : index
    %38 = vector.load %arg3[%c4_30, %c0_31] : memref<8x128xf32, #tpu.memory_space<vmem>>, vector<1x128xf32>
    %39 = arith.addf %37, %38 : vector<1x128xf32>
    %cst_32 = arith.constant 0.000000e+00 : f32
    %40 = vector.broadcast %cst_32 : f32 to vector<1x128xf32>
    %41 = arith.maximumf %39, %40 : vector<1x128xf32>
    %c5 = arith.constant 5 : index
    %c0_33 = arith.constant 0 : index
    %c0_34 = arith.constant 0 : index
    %42 = vector.load %arg2[%c5, %c0_33, %c0_34] : memref<8x128x128xf32, #tpu.memory_space<vmem>>, vector<1x128x128xf32>
    %43 = vector.shape_cast %42 : vector<1x128x128xf32> to vector<128x128xf32>
    %cst_35 = arith.constant dense<0.000000e+00> : vector<1x128xf32>
    %44 = tpu.matmul %41, %43, %cst_35 {dimension_numbers = #tpu.dot_dimension_numbers<[1], [0], [0], [1], [0, 0, 1, 1], [], []>} : vector<1x128xf32>, vector<128x128xf32>, vector<1x128xf32> -> vector<1x128xf32>
    %c5_36 = arith.constant 5 : index
    %c0_37 = arith.constant 0 : index
    %45 = vector.load %arg3[%c5_36, %c0_37] : memref<8x128xf32, #tpu.memory_space<vmem>>, vector<1x128xf32>
    %46 = arith.addf %44, %45 : vector<1x128xf32>
    %cst_38 = arith.constant 0.000000e+00 : f32
    %47 = vector.broadcast %cst_38 : f32 to vector<1x128xf32>
    %48 = arith.maximumf %46, %47 : vector<1x128xf32>
    %c6 = arith.constant 6 : index
    %c0_39 = arith.constant 0 : index
    %c0_40 = arith.constant 0 : index
    %49 = vector.load %arg2[%c6, %c0_39, %c0_40] : memref<8x128x128xf32, #tpu.memory_space<vmem>>, vector<1x128x128xf32>
    %50 = vector.shape_cast %49 : vector<1x128x128xf32> to vector<128x128xf32>
    %cst_41 = arith.constant dense<0.000000e+00> : vector<1x128xf32>
    %51 = tpu.matmul %48, %50, %cst_41 {dimension_numbers = #tpu.dot_dimension_numbers<[1], [0], [0], [1], [0, 0, 1, 1], [], []>} : vector<1x128xf32>, vector<128x128xf32>, vector<1x128xf32> -> vector<1x128xf32>
    %c6_42 = arith.constant 6 : index
    %c0_43 = arith.constant 0 : index
    %52 = vector.load %arg3[%c6_42, %c0_43] : memref<8x128xf32, #tpu.memory_space<vmem>>, vector<1x128xf32>
    %53 = arith.addf %51, %52 : vector<1x128xf32>
    %cst_44 = arith.constant 0.000000e+00 : f32
    %54 = vector.broadcast %cst_44 : f32 to vector<1x128xf32>
    %55 = arith.maximumf %53, %54 : vector<1x128xf32>
    %c7 = arith.constant 7 : index
    %c0_45 = arith.constant 0 : index
    %c0_46 = arith.constant 0 : index
    %56 = vector.load %arg2[%c7, %c0_45, %c0_46] : memref<8x128x128xf32, #tpu.memory_space<vmem>>, vector<1x128x128xf32>
    %57 = vector.shape_cast %56 : vector<1x128x128xf32> to vector<128x128xf32>
    %cst_47 = arith.constant dense<0.000000e+00> : vector<1x128xf32>
    %58 = tpu.matmul %55, %57, %cst_47 {dimension_numbers = #tpu.dot_dimension_numbers<[1], [0], [0], [1], [0, 0, 1, 1], [], []>} : vector<1x128xf32>, vector<128x128xf32>, vector<1x128xf32> -> vector<1x128xf32>
    %c7_48 = arith.constant 7 : index
    %c0_49 = arith.constant 0 : index
    %59 = vector.load %arg3[%c7_48, %c0_49] : memref<8x128xf32, #tpu.memory_space<vmem>>, vector<1x128xf32>
    %60 = arith.addf %58, %59 : vector<1x128xf32>
    %61 = tpu.iota {dimensions = array<i32: 1>} : vector<1x128xi32>
    %cst_50 = arith.constant -8.000000e+00 : f32
    %62 = vector.broadcast %cst_50 : f32 to vector<1x128xf32>
    %63 = arith.maximumf %60, %62 : vector<1x128xf32>
    %c5_i32 = arith.constant 5 : i32
    %64 = vector.broadcast %c5_i32 : i32 to vector<1x128xi32>
    %65 = arith.cmpi sge, %61, %64 : vector<1x128xi32>
    %66 = arith.select %65, %63, %60 : vector<1x128xi1>, vector<1x128xf32>
    %67 = vector.shape_cast %66 : vector<1x128xf32> to vector<1x128xf32>
    %68 = vector.broadcast %67 : vector<1x128xf32> to vector<8x128xf32>
    %c0_51 = arith.constant 0 : index
    %c0_52 = arith.constant 0 : index
    %c0_53 = arith.constant 0 : index
    %69 = vector.load %arg4[%c0_51, %c0_52, %c0_53] : memref<1x8x128xf32, #tpu.memory_space<vmem>>, vector<1x8x128xf32>
    %70 = vector.shape_cast %69 : vector<1x8x128xf32> to vector<8x128xf32>
    %71 = vector.shape_cast %68 : vector<8x128xf32> to vector<1x8x128xf32>
    tpu.vector_store %arg4[%c0_51, %c0_52, %c0_53], %71 {strides = array<i32>} : memref<1x8x128xf32, #tpu.memory_space<vmem>>, vector<1x8x128xf32>,
    return
  }
  func.func @transform_0(%arg0: i32) -> (i32, i32, i32) {
    %c0_i32 = arith.constant 0 : i32
    %c0_i32_0 = arith.constant 0 : i32
    %c0_i32_1 = arith.constant 0 : i32
    return %arg0, %c0_i32, %c0_i32_0 : i32, i32, i32
  }
  func.func @transform_1(%arg0: i32) -> (i32, i32, i32) {
    %c0_i32 = arith.constant 0 : i32
    %c0_i32_0 = arith.constant 0 : i32
    %c0_i32_1 = arith.constant 0 : i32
    %c0_i32_2 = arith.constant 0 : i32
    return %c0_i32, %c0_i32_0, %c0_i32_1 : i32, i32, i32
  }
  func.func @transform_2(%arg0: i32) -> (i32, i32) {
    %c0_i32 = arith.constant 0 : i32
    %c0_i32_0 = arith.constant 0 : i32
    %c0_i32_1 = arith.constant 0 : i32
    return %c0_i32, %c0_i32_0 : i32, i32
  }
  func.func @transform_3(%arg0: i32) -> (i32, i32, i32) {
    %c0_i32 = arith.constant 0 : i32
    %c0_i32_0 = arith.constant 0 : i32
    %c0_i32_1 = arith.constant 0 : i32
    return %arg0, %c0_i32, %c0_i32_0 : i32, i32, i32
  }
}

</mosaic_0001>

<llo_original>
// kernel: tpu_custom_call.1
$region0: #{tpu_custom_call.1}
  #allocation0 [shape = 'u32[]', space=smem, size = 0x4, offset = 0x4, fixed_abs, tag = 'smem constant byte address 0x4 - core index']
  #allocation1 [shape = 'u32[144,128]{1,0:T(1,128)}', space=vmem, size = 0x12000, scoped, tag = 'internal scratch']
  %s0 = inlined_call_operand.hbm [shape: f32[4,8,128], index: 0, kind: input, shape index: {}]
  %s1 = inlined_call_operand.hbm [shape: f32[8,128,128], index: 1, kind: input, shape index: {}]
  %s2 = inlined_call_operand.hbm [shape: f32[8,128], index: 2, kind: input, shape index: {}]
  %s3 = inlined_call_operand.hbm [shape: f32[4,8,128], index: 3, kind: output, shape index: {}]
  %s4 = sld [smem:[#allocation0]]
  $region57: #{tpu_custom_call.1} parent=0
    _
  %s6 = ssub.s32 1, %s4
  %s7 = scalar_select 0, %s6, %s4
  $region1: #{tpu_custom_call.1} parent=0
    #allocation2 [shape = 'u8[8192]{0}', space=vmem, size = 0x2000, scoped, tag = 'input window, operand 0']
    #allocation3 [shape = 's32[2]{0}', space=sflag, size = 0x8, scoped, tag = 'scoped memory for tpu_custom_call.1']
    #allocation4 [shape = 's32[2]{0}', space=sflag, size = 0x8, scoped, tag = 'scoped memory for tpu_custom_call.1']
    #allocation5 [shape = 'u8[524288]{0}', space=vmem, size = 0x80000, scoped, tag = 'input window, operand 1, single buffered']
    #allocation6 [shape = 's32[1]{0}', space=sflag, size = 0x4, scoped, tag = 'scoped memory for tpu_custom_call.1']
    #allocation7 [shape = 'u8[4096]{0}', space=vmem, size = 0x1000, scoped, tag = 'input window, operand 2, single buffered']
    #allocation8 [shape = 'u8[8192]{0}', space=vmem, size = 0x2000, scoped, tag = 'output window, operand 0']
    %8 = vsyncpa [#allocation3], 0
    %s9 = scalar_lea.sflag [#allocation3], 1
    %10 = vsyncpa %s9, 0
    %11 = vsyncpa [#allocation6], 0
    %12 = vsyncpa [#allocation4], 0
    %s13 = scalar_lea.sflag [#allocation4], 1
    %14 = vsyncpa %s13, 0
    loop: start=0, step=1, limit=6
    $region2: #{tpu_custom_call.1} parent=1 // loop_pre_header
      _
    $region3: #{tpu_custom_call.1} parent=1 // loop_header
      %s16 = sphi 0, %s20
      %p17 = scmp.ge.s32.totalorder %s16, 6
      %s26 = sphi 0, %s28
      %s29 = sphi 0, %s26
      %s30 = sphi 0, %s29
      %s46 = sphi 0, %s30
      %s50 = sphi 0, %s50
      %s52 = sphi 0, %s50
      %s53 = sphi 0, %s52
      %s67 = sphi 0, %s53
      %s71 = sphi 0, %s71
      %s73 = sphi 0, %s71
      %s74 = sphi 0, %s73
      %s88 = sphi 0, %s74
      %s94 = sphi 0, %s96
      %s97 = sphi 0, %s94
      %s98 = sphi 0, %s97
      %s114 = sphi 0, %s98
    $region4: #{tpu_custom_call.1} parent=1 // loop_header_branch
      %19 = sbr.rel (%p17) target = $region8
    $region5: #{tpu_custom_call.1} parent=1 // loop_body
      %s21 = ssub.s32 %s16, 1
      %s22 = ssub.s32 %s16, 2
      %s23 = sadd.s32 %s16, 1
      %s24 = ssub.s32 %s16, %s23
      %p25 = scmp.eq.s32.totalorder %s24, 0
      %s27 = sadd.s32 %s26, 1
      %s28 = scalar_select %p25, %s26, %s27
      %p31 = pneg %p25
      %p32 = scmp.eq.s32.totalorder %s16, 3
      %p33 = por %p31, %p32
      %p34 = scmp.ne.s32.totalorder %s26, %s29
      %p35 = scmp.eq.s32.totalorder %s16, 0
      %p36 = por %p34, %p35
      %p37 = scmp.ne.s32.totalorder %s26, %s29
      %p38 = scmp.eq.s32.totalorder %s21, 3
      %p39 = por %p37, %p38
      %p40 = scmp.ne.s32.totalorder %s29, %s30
      %p41 = scmp.eq.s32.totalorder %s21, 0
      %p42 = por %p40, %p41
      %p43 = scmp.ne.s32.totalorder %s29, %s30
      %p44 = scmp.eq.s32.totalorder %s22, 3
      %p45 = por %p43, %p44
      %p47 = scmp.ne.s32.totalorder %s30, %s46
      %p48 = scmp.eq.s32.totalorder %s22, 0
      %p49 = por %p47, %p48
      %s51 = sadd.s32 %s50, 1
      %p54 = scmp.eq.s32.totalorder %s16, 3
      %p55 = scmp.ne.s32.totalorder %s50, %s52
      %p56 = scmp.eq.s32.totalorder %s16, 0
      %p57 = por %p55, %p56
      %p58 = scmp.ne.s32.totalorder %s50, %s52
      %p59 = scmp.eq.s32.totalorder %s21, 3
      %p60 = por %p58, %p59
      %p61 = scmp.ne.s32.totalorder %s52, %s53
      %p62 = scmp.eq.s32.totalorder %s21, 0
      %p63 = por %p61, %p62
      %p64 = scmp.ne.s32.totalorder %s52, %s53
      %p65 = scmp.eq.s32.totalorder %s22, 3
      %p66 = por %p64, %p65
      %p68 = scmp.ne.s32.totalorder %s53, %s67
      %p69 = scmp.eq.s32.totalorder %s22, 0
      %p70 = por %p68, %p69
      %s72 = sadd.s32 %s71, 1
      %p75 = scmp.eq.s32.totalorder %s16, 3
      %p76 = scmp.ne.s32.totalorder %s71, %s73
      %p77 = scmp.eq.s32.totalorder %s16, 0
      %p78 = por %p76, %p77
      %p79 = scmp.ne.s32.totalorder %s71, %s73
      %p80 = scmp.eq.s32.totalorder %s21, 3
      %p81 = por %p79, %p80
      %p82 = scmp.ne.s32.totalorder %s73, %s74
      %p83 = scmp.eq.s32.totalorder %s21, 0
      %p84 = por %p82, %p83
      %p85 = scmp.ne.s32.totalorder %s73, %s74
      %p86 = scmp.eq.s32.totalorder %s22, 3
      %p87 = por %p85, %p86
      %p89 = scmp.ne.s32.totalorder %s74, %s88
      %p90 = scmp.eq.s32.totalorder %s22, 0
      %p91 = por %p89, %p90
      %s92 = ssub.s32 %s16, %s23
      %p93 = scmp.eq.s32.totalorder %s92, 0
      %s95 = sadd.s32 %s94, 1
      %s96 = scalar_select %p93, %s94, %s95
      %p99 = pneg %p93
      %p100 = scmp.eq.s32.totalorder %s16, 3
      %p101 = por %p99, %p100
      %p102 = scmp.ne.s32.totalorder %s94, %s97
      %p103 = scmp.eq.s32.totalorder %s16, 0
      %p104 = por %p102, %p103
      %p105 = scmp.ne.s32.totalorder %s94, %s97
      %p106 = scmp.eq.s32.totalorder %s21, 3
      %p107 = por %p105, %p106
      %p108 = scmp.ne.s32.totalorder %s97, %s98
      %p109 = scmp.eq.s32.totalorder %s21, 0
      %p110 = por %p108, %p109
      %p111 = scmp.ne.s32.totalorder %s97, %s98
      %p112 = scmp.eq.s32.totalorder %s22, 3
      %p113 = por %p111, %p112
      %p115 = scmp.ne.s32.totalorder %s98, %s114
      %p116 = scmp.eq.s32.totalorder %s22, 0
      %p117 = por %p115, %p116
      %p118 = scmp.le.s32.totalorder 1, %s16
      %p119 = scmp.lt.s32.totalorder %s16, 5
      %p120 = pnand %p118, %p119
      %p121 = pneg %p120
      // Predicated region
      $region9: #{tpu_custom_call.1} parent=5 // pred_check
        _
      $region10: #{tpu_custom_call.1} parent=5 // pred_check_branch
        %123 = sbr.rel (%p120) target = $region12
      $region11: #{tpu_custom_call.1} parent=5 // pred_region
        %s124 = ssub.s32 %s16, 1
        // Predicated region
        $region13: #{tpu_custom_call.1} parent=11 // pred_check
          %p125 = pneg %p63
        $region14: #{tpu_custom_call.1} parent=11 // pred_check_branch
          %127 = sbr.rel (%p125) target = $region16
        $region15: #{tpu_custom_call.1} parent=11 // pred_region
          %s129 = ssub.s32 16384, 16384
          %130 = vsyncadd [#allocation6], %s129
          %s131 = sshll.u32 [#allocation5], 4
          %s132 = int_to_ptr.vmem [resolvable:$true] %s131
          %137 = dma.hbm_to_vmem [thread:$0]  %s1, 16384, %s132, [#allocation6], 128, 128, 8
        $region16: #{tpu_custom_call.1} parent=11 // pred_fallthru
          _
        // Predicated region
        $region17: #{tpu_custom_call.1} parent=11 // pred_check
          %p138 = pneg %p84
        $region18: #{tpu_custom_call.1} parent=11 // pred_check_branch
          %140 = sbr.rel (%p138) target = $region20
        $region19: #{tpu_custom_call.1} parent=11 // pred_region
          %s142 = ssub.s32 128, 128
          %143 = vsyncadd [#allocation6], %s142
          %s145 = sshll.u32 [#allocation7], 4
          %s146 = int_to_ptr.vmem [resolvable:$true] %s145
          %148 = dma.hbm_to_vmem [thread:$0]  %s2, 128, %s146, [#allocation6]
        $region20: #{tpu_custom_call.1} parent=11 // pred_fallthru
          _
      $region12: #{tpu_custom_call.1} parent=5 // pred_fallthru
        _
      %p149 = scmp.lt.s32.totalorder %s16, 4
      // Predicated region
      $region21: #{tpu_custom_call.1} parent=5 // pred_check
        %p150 = pneg %p149
      $region22: #{tpu_custom_call.1} parent=5 // pred_check_branch
        %152 = sbr.rel (%p150) target = $region24
      $region23: #{tpu_custom_call.1} parent=5 // pred_region
        // Predicated region
        $region25: #{tpu_custom_call.1} parent=23 // pred_check
          %p153 = pneg %p36
        $region26: #{tpu_custom_call.1} parent=23 // pred_check_branch
          %155 = sbr.rel (%p153) target = $region28
        $region27: #{tpu_custom_call.1} parent=23 // pred_region
          %s156 = sand.u32 %s26, 1
          %s157 = scalar_lea.sflag [#allocation3], %s156
          %s158 = sand.u32 %s26, 1
          %s159 = smul.addr %s158, 8
          %s160 = scalar_lea.vmem [#allocation2], %s159
          %s162 = ssub.s32 128, 128
          %163 = vsyncadd %s157, %s162
          %s164 = smul.addr %s16, 128
          %s165 = scalar_lea.hbm %s0, %s164
          %s167 = sshll.u32 %s160, 4
          %s168 = int_to_ptr.vmem [resolvable:$true] %s167
          %170 = dma.hbm_to_vmem [thread:$0]  %s165, 128, %s168, %s157
        $region28: #{tpu_custom_call.1} parent=23 // pred_fallthru
          _
      $region24: #{tpu_custom_call.1} parent=5 // pred_fallthru
        _
      %p171 = scmp.le.s32.totalorder 1, %s16
      %p172 = scmp.lt.s32.totalorder %s16, 5
      %p173 = pnand %p171, %p172
      %p174 = pneg %p173
      // Predicated region
      $region29: #{tpu_custom_call.1} parent=5 // pred_check
        _
      $region30: #{tpu_custom_call.1} parent=5 // pred_check_branch
        %176 = sbr.rel (%p173) target = $region32
      $region31: #{tpu_custom_call.1} parent=5 // pred_region
        %s177 = ssub.s32 %s16, 1
        %s178 = sand.u32 %s29, 1
        %s179 = scalar_lea.sflag [#allocation3], %s178
        %s180 = sand.u32 %s29, 1
        %s181 = smul.addr %s180, 8
        %s182 = scalar_lea.vmem [#allocation2], %s181
        // Predicated region
        $region33: #{tpu_custom_call.1} parent=31 // pred_check
          %p183 = pneg %p42
        $region34: #{tpu_custom_call.1} parent=31 // pred_check_branch
          %185 = sbr.rel (%p183) target = $region36
        $region35: #{tpu_custom_call.1} parent=31 // pred_region
          %186 = dma.done %s179, 128
        $region36: #{tpu_custom_call.1} parent=31 // pred_fallthru
          _
        // Predicated region
        $region37: #{tpu_custom_call.1} parent=31 // pred_check
          %p187 = pneg %p63
        $region38: #{tpu_custom_call.1} parent=31 // pred_check_branch
          %189 = sbr.rel (%p187) target = $region40
        $region39: #{tpu_custom_call.1} parent=31 // pred_region
          %190 = dma.done [#allocation6], 16384
        $region40: #{tpu_custom_call.1} parent=31 // pred_fallthru
          _
        // Predicated region
        $region41: #{tpu_custom_call.1} parent=31 // pred_check
          %p191 = pneg %p84
        $region42: #{tpu_custom_call.1} parent=31 // pred_check_branch
          %193 = sbr.rel (%p191) target = $region44
        $region43: #{tpu_custom_call.1} parent=31 // pred_region
          %194 = dma.done [#allocation6], 128
        $region44: #{tpu_custom_call.1} parent=31 // pred_fallthru
          _
        %s195 = sand.u32 %s29, 1
        %s196 = scalar_lea.sflag [#allocation3], %s195
        %s197 = sand.u32 %s29, 1
        %s198 = smul.addr %s197, 8
        %s199 = scalar_lea.vmem [#allocation2], %s198
        %p200 = pneg %p42
        %p201 = pneg %p39
        %p202 = pneg %p63
        %p203 = pneg %p60
        %p204 = pneg %p84
        %p205 = pneg %p81
        %p206 = pneg %p110
        %p207 = pneg %p107
        %s208 = sand.u32 %s97, 1
        %s209 = scalar_lea.sflag [#allocation4], %s208
        %s210 = sand.u32 %s97, 1
        %s211 = smul.addr %s210, 8
        %s212 = scalar_lea.vmem [#allocation8], %s211
        %v213 = vld [vmem:[%s182] sm:$0xff]
        %v214 = vld [vmem:[#allocation5] sm:$0xff]
        %v215 = vld [vmem:[#allocation5 + $0x8] sm:$0xff]
        %v216 = vld [vmem:[#allocation5 + $0x10] sm:$0xff]
        %v217 = vld [vmem:[#allocation5 + $0x18] sm:$0xff]
        %v218 = vld [vmem:[#allocation5 + $0x20] sm:$0xff]
        %v219 = vld [vmem:[#allocation5 + $0x28] sm:$0xff]
        %v220 = vld [vmem:[#allocation5 + $0x30] sm:$0xff]
        %v221 = vld [vmem:[#allocation5 + $0x38] sm:$0xff]
        %v222 = vld [vmem:[#allocation5 + $0x40] sm:$0xff]
        %v223 = vld [vmem:[#allocation5 + $0x48] sm:$0xff]
        %v224 = vld [vmem:[#allocation5 + $0x50] sm:$0xff]
        %v225 = vld [vmem:[#allocation5 + $0x58] sm:$0xff]
        %v226 = vld [vmem:[#allocation5 + $0x60] sm:$0xff]
        %v227 = vld [vmem:[#allocation5 + $0x68] sm:$0xff]
        %v228 = vld [vmem:[#allocation5 + $0x70] sm:$0xff]
        %v229 = vld [vmem:[#allocation5 + $0x78] sm:$0xff]
        %v230 = vld [vmem:[#allocation7] sm:$0x1]
        %v231 = vlaneseq
        %v232 = vshrl.u32 %v231, 7
        %v233 = vsub.s32 0, %v232
        %v234 = vrot.slane %v230, %v233
        %235 = vmatprep.subr.mxu0 0.0
        %236 = vmatpush1.msra.mxu0 %v229
        %237 = vmatprep.subr.mxu0 0.0
        %238 = vmatpush1.msra.mxu0 %v228
        %239 = vmatprep.subr.mxu0 0.0
        %240 = vmatpush1.msra.mxu0 %v227
        %241 = vmatprep.subr.mxu0 0.0
        %242 = vmatpush1.msra.mxu0 %v226
        %243 = vmatprep.subr.mxu0 0.0
        %244 = vmatpush1.msra.mxu0 %v225
        %245 = vmatprep.subr.mxu0 0.0
        %246 = vmatpush1.msra.mxu0 %v224
        %247 = vmatprep.subr.mxu0 0.0
        %248 = vmatpush1.msra.mxu0 %v223
        %249 = vmatprep.subr.mxu0 0.0
        %250 = vmatpush1.msra.mxu0 %v222
        %251 = vmatprep.subr.mxu0 0.0
        %252 = vmatpush1.msra.mxu0 %v221
        %253 = vmatprep.subr.mxu0 0.0
        %254 = vmatpush1.msra.mxu0 %v220
        %255 = vmatprep.subr.mxu0 0.0
        %256 = vmatpush1.msra.mxu0 %v219
        %257 = vmatprep.subr.mxu0 0.0
        %258 = vmatpush1.msra.mxu0 %v218
        %259 = vmatprep.subr.mxu0 0.0
        %260 = vmatpush1.msra.mxu0 %v217
        %261 = vmatprep.subr.mxu0 0.0
        %262 = vmatpush1.msra.mxu0 %v216
        %263 = vmatprep.subr.mxu0 0.0
        %264 = vmatpush1.msra.mxu0 %v215
        %265 = vmatprep.subr.mxu0 0.0
        %266 = vmatpush1.msra.mxu0 %v214
        %267 = vmatprep.subr.mxu0 0.0
        %268 = vmatpush2.msra.mxu0 0.0
        %269 = vmatprep.subr.mxu0 0.0
        %270 = vmatpush2.msra.mxu0 0.0
        %271 = vmatprep.subr.mxu0 0.0
        %272 = vmatpush2.msra.mxu0 0.0
        %273 = vmatprep.subr.mxu0 0.0
        %274 = vmatpush2.msra.mxu0 0.0
        %275 = vmatprep.subr.mxu0 0.0
        %276 = vmatpush2.msra.mxu0 0.0
        %277 = vmatprep.subr.mxu0 0.0
        %278 = vmatpush2.msra.mxu0 0.0
        %279 = vmatprep.subr.mxu0 0.0
        %280 = vmatpush2.msra.mxu0 0.0
        %281 = vmatprep.subr.mxu0 0.0
        %282 = vmatpush2.msra.mxu0 0.0
        %283 = vmatprep.subr.mxu0 0.0
        %284 = vmatpush2.msra.mxu0 0.0
        %285 = vmatprep.subr.mxu0 0.0
        %286 = vmatpush2.msra.mxu0 0.0
        %287 = vmatprep.subr.mxu0 0.0
        %288 = vmatpush2.msra.mxu0 0.0
        %289 = vmatprep.subr.mxu0 0.0
        %290 = vmatpush2.msra.mxu0 0.0
        %291 = vmatprep.subr.mxu0 0.0
        %292 = vmatpush2.msra.mxu0 0.0
        %293 = vmatprep.subr.mxu0 0.0
        %294 = vmatpush2.msra.mxu0 0.0
        %295 = vmatprep.subr.mxu0 0.0
        %296 = vmatpush2.msra.mxu0 0.0
        %297 = vmatprep.subr.mxu0 0.0
        %298 = vmatpush2.msra.mxu0 0.0
        %299 = vmatprep.mubr.f32.mxu0 0.0
        %300 = vmatmul.mubr.f32.gmra.mxu0 %v213
        %v301 = vpop.f32.mrf.mxu0
        %v302 = vadd.f32 %v234, %v301
        %v303 = vpop.f32.mrf.mxu0
        %304 = vdwg.mxu0
        %v305 = vmax.f32 %v302, 0.0
        %s306 = scalar_lea.vmem [#allocation5], 128
        %v307 = vld [vmem:[%s306] sm:$0xff]
        %v308 = vld [vmem:[%s306 + $0x8] sm:$0xff]
        %v309 = vld [vmem:[%s306 + $0x10] sm:$0xff]
        %v310 = vld [vmem:[%s306 + $0x18] sm:$0xff]
        %v311 = vld [vmem:[%s306 + $0x20] sm:$0xff]
        %v312 = vld [vmem:[%s306 + $0x28] sm:$0xff]
        %v313 = vld [vmem:[%s306 + $0x30] sm:$0xff]
        %v314 = vld [vmem:[%s306 + $0x38] sm:$0xff]
        %v315 = vld [vmem:[%s306 + $0x40] sm:$0xff]
        %v316 = vld [vmem:[%s306 + $0x48] sm:$0xff]
        %v317 = vld [vmem:[%s306 + $0x50] sm:$0xff]
        %v318 = vld [vmem:[%s306 + $0x58] sm:$0xff]
        %v319 = vld [vmem:[%s306 + $0x60] sm:$0xff]
        %v320 = vld [vmem:[%s306 + $0x68] sm:$0xff]
        %v321 = vld [vmem:[%s306 + $0x70] sm:$0xff]
        %v322 = vld [vmem:[%s306 + $0x78] sm:$0xff]
        %v323 = vld [vmem:[#allocation7 + $0x1] sm:$0x1]
        %v324 = vlaneseq
        %v325 = vshrl.u32 %v324, 7
        %v326 = vsub.s32 0, %v325
        %v327 = vrot.slane %v323, %v326
        %328 = vmatprep.subr.mxu0 0.0
        %329 = vmatpush1.msra.mxu0 %v322
        %330 = vmatprep.subr.mxu0 0.0
        %331 = vmatpush1.msra.mxu0 %v321
        %332 = vmatprep.subr.mxu0 0.0
        %333 = vmatpush1.msra.mxu0 %v320
        %334 = vmatprep.subr.mxu0 0.0
        %335 = vmatpush1.msra.mxu0 %v319
        %336 = vmatprep.subr.mxu0 0.0
        %337 = vmatpush1.msra.mxu0 %v318
        %338 = vmatprep.subr.mxu0 0.0
        %339 = vmatpush1.msra.mxu0 %v317
        %340 = vmatprep.subr.mxu0 0.0
        %341 = vmatpush1.msra.mxu0 %v316
        %342 = vmatprep.subr.mxu0 0.0
        %343 = vmatpush1.msra.mxu0 %v315
        %344 = vmatprep.subr.mxu0 0.0
        %345 = vmatpush1.msra.mxu0 %v314
        %346 = vmatprep.subr.mxu0 0.0
        %347 = vmatpush1.msra.mxu0 %v313
        %348 = vmatprep.subr.mxu0 0.0
        %349 = vmatpush1.msra.mxu0 %v312
        %350 = vmatprep.subr.mxu0 0.0
        %351 = vmatpush1.msra.mxu0 %v311
        %352 = vmatprep.subr.mxu0 0.0
        %353 = vmatpush1.msra.mxu0 %v310
        %354 = vmatprep.subr.mxu0 0.0
        %355 = vmatpush1.msra.mxu0 %v309
        %356 = vmatprep.subr.mxu0 0.0
        %357 = vmatpush1.msra.mxu0 %v308
        %358 = vmatprep.subr.mxu0 0.0
        %359 = vmatpush1.msra.mxu0 %v307
        %360 = vmatprep.subr.mxu0 0.0
        %361 = vmatpush2.msra.mxu0 0.0
        %362 = vmatprep.subr.mxu0 0.0
        %363 = vmatpush2.msra.mxu0 0.0
        %364 = vmatprep.subr.mxu0 0.0
        %365 = vmatpush2.msra.mxu0 0.0
        %366 = vmatprep.subr.mxu0 0.0
        %367 = vmatpush2.msra.mxu0 0.0
        %368 = vmatprep.subr.mxu0 0.0
        %369 = vmatpush2.msra.mxu0 0.0
        %370 = vmatprep.subr.mxu0 0.0
        %371 = vmatpush2.msra.mxu0 0.0
        %372 = vmatprep.subr.mxu0 0.0
        %373 = vmatpush2.msra.mxu0 0.0
        %374 = vmatprep.subr.mxu0 0.0
        %375 = vmatpush2.msra.mxu0 0.0
        %376 = vmatprep.subr.mxu0 0.0
        %377 = vmatpush2.msra.mxu0 0.0
        %378 = vmatprep.subr.mxu0 0.0
        %379 = vmatpush2.msra.mxu0 0.0
        %380 = vmatprep.subr.mxu0 0.0
        %381 = vmatpush2.msra.mxu0 0.0
        %382 = vmatprep.subr.mxu0 0.0
        %383 = vmatpush2.msra.mxu0 0.0
        %384 = vmatprep.subr.mxu0 0.0
        %385 = vmatpush2.msra.mxu0 0.0
        %386 = vmatprep.subr.mxu0 0.0
        %387 = vmatpush2.msra.mxu0 0.0
        %388 = vmatprep.subr.mxu0 0.0
        %389 = vmatpush2.msra.mxu0 0.0
        %390 = vmatprep.subr.mxu0 0.0
        %391 = vmatpush2.msra.mxu0 0.0
        %392 = vmatprep.mubr.f32.mxu0 0.0
        %393 = vmatmul.mubr.f32.gmra.mxu0 %v305
        %v394 = vpop.f32.mrf.mxu0
        %v395 = vadd.f32 %v327, %v394
        %v396 = vpop.f32.mrf.mxu0
        %397 = vdwg.mxu0
        %v398 = vmax.f32 %v395, 0.0
        %s399 = scalar_lea.vmem [#allocation5], 256
        %v400 = vld [vmem:[%s399] sm:$0xff]
        %v401 = vld [vmem:[%s399 + $0x8] sm:$0xff]
        %v402 = vld [vmem:[%s399 + $0x10] sm:$0xff]
        %v403 = vld [vmem:[%s399 + $0x18] sm:$0xff]
        %v404 = vld [vmem:[%s399 + $0x20] sm:$0xff]
        %v405 = vld [vmem:[%s399 + $0x28] sm:$0xff]
        %v406 = vld [vmem:[%s399 + $0x30] sm:$0xff]
        %v407 = vld [vmem:[%s399 + $0x38] sm:$0xff]
        %v408 = vld [vmem:[%s399 + $0x40] sm:$0xff]
        %v409 = vld [vmem:[%s399 + $0x48] sm:$0xff]
        %v410 = vld [vmem:[%s399 + $0x50] sm:$0xff]
        %v411 = vld [vmem:[%s399 + $0x58] sm:$0xff]
        %v412 = vld [vmem:[%s399 + $0x60] sm:$0xff]
        %v413 = vld [vmem:[%s399 + $0x68] sm:$0xff]
        %v414 = vld [vmem:[%s399 + $0x70] sm:$0xff]
        %v415 = vld [vmem:[%s399 + $0x78] sm:$0xff]
        %v416 = vld [vmem:[#allocation7 + $0x2] sm:$0x1]
        %v417 = vlaneseq
        %v418 = vshrl.u32 %v417, 7
        %v419 = vsub.s32 0, %v418
        %v420 = vrot.slane %v416, %v419
        %421 = vmatprep.subr.mxu0 0.0
        %422 = vmatpush1.msra.mxu0 %v415
        %423 = vmatprep.subr.mxu0 0.0
        %424 = vmatpush1.msra.mxu0 %v414
        %425 = vmatprep.subr.mxu0 0.0
        %426 = vmatpush1.msra.mxu0 %v413
        %427 = vmatprep.subr.mxu0 0.0
        %428 = vmatpush1.msra.mxu0 %v412
        %429 = vmatprep.subr.mxu0 0.0
        %430 = vmatpush1.msra.mxu0 %v411
        %431 = vmatprep.subr.mxu0 0.0
        %432 = vmatpush1.msra.mxu0 %v410
        %433 = vmatprep.subr.mxu0 0.0
        %434 = vmatpush1.msra.mxu0 %v409
        %435 = vmatprep.subr.mxu0 0.0
        %436 = vmatpush1.msra.mxu0 %v408
        %437 = vmatprep.subr.mxu0 0.0
        %438 = vmatpush1.msra.mxu0 %v407
        %439 = vmatprep.subr.mxu0 0.0
        %440 = vmatpush1.msra.mxu0 %v406
        %441 = vmatprep.subr.mxu0 0.0
        %442 = vmatpush1.msra.mxu0 %v405
        %443 = vmatprep.subr.mxu0 0.0
        %444 = vmatpush1.msra.mxu0 %v404
        %445 = vmatprep.subr.mxu0 0.0
        %446 = vmatpush1.msra.mxu0 %v403
        %447 = vmatprep.subr.mxu0 0.0
        %448 = vmatpush1.msra.mxu0 %v402
        %449 = vmatprep.subr.mxu0 0.0
        %450 = vmatpush1.msra.mxu0 %v401
        %451 = vmatprep.subr.mxu0 0.0
        %452 = vmatpush1.msra.mxu0 %v400
        %453 = vmatprep.subr.mxu0 0.0
        %454 = vmatpush2.msra.mxu0 0.0
        %455 = vmatprep.subr.mxu0 0.0
        %456 = vmatpush2.msra.mxu0 0.0
        %457 = vmatprep.subr.mxu0 0.0
        %458 = vmatpush2.msra.mxu0 0.0
        %459 = vmatprep.subr.mxu0 0.0
        %460 = vmatpush2.msra.mxu0 0.0
        %461 = vmatprep.subr.mxu0 0.0
        %462 = vmatpush2.msra.mxu0 0.0
        %463 = vmatprep.subr.mxu0 0.0
        %464 = vmatpush2.msra.mxu0 0.0
        %465 = vmatprep.subr.mxu0 0.0
        %466 = vmatpush2.msra.mxu0 0.0
        %467 = vmatprep.subr.mxu0 0.0
        %468 = vmatpush2.msra.mxu0 0.0
        %469 = vmatprep.subr.mxu0 0.0
        %470 = vmatpush2.msra.mxu0 0.0
        %471 = vmatprep.subr.mxu0 0.0
        %472 = vmatpush2.msra.mxu0 0.0
        %473 = vmatprep.subr.mxu0 0.0
        %474 = vmatpush2.msra.mxu0 0.0
        %475 = vmatprep.subr.mxu0 0.0
        %476 = vmatpush2.msra.mxu0 0.0
        %477 = vmatprep.subr.mxu0 0.0
        %478 = vmatpush2.msra.mxu0 0.0
        %479 = vmatprep.subr.mxu0 0.0
        %480 = vmatpush2.msra.mxu0 0.0
        %481 = vmatprep.subr.mxu0 0.0
        %482 = vmatpush2.msra.mxu0 0.0
        %483 = vmatprep.subr.mxu0 0.0
        %484 = vmatpush2.msra.mxu0 0.0
        %485 = vmatprep.mubr.f32.mxu0 0.0
        %486 = vmatmul.mubr.f32.gmra.mxu0 %v398
        %v487 = vpop.f32.mrf.mxu0
        %v488 = vadd.f32 %v420, %v487
        %v489 = vpop.f32.mrf.mxu0
        %490 = vdwg.mxu0
        %v491 = vmax.f32 %v488, 0.0
        %v492 = vrot.slane %v491, 4
        %v493 = vadd.f32 %v491, %v492
        %v494 = vrot.slane %v493, 2
        %v495 = vadd.f32 %v493, %v494
        %v496 = vrot.slane %v495, 1
        %v497 = vadd.f32 %v495, %v496
        %s498 = scalar_lea.vmem [#allocation5], 384
        %v499 = vld [vmem:[%s498] sm:$0xff]
        %v500 = vld [vmem:[%s498 + $0x8] sm:$0xff]
        %v501 = vld [vmem:[%s498 + $0x10] sm:$0xff]
        %v502 = vld [vmem:[%s498 + $0x18] sm:$0xff]
        %v503 = vld [vmem:[%s498 + $0x20] sm:$0xff]
        %v504 = vld [vmem:[%s498 + $0x28] sm:$0xff]
        %v505 = vld [vmem:[%s498 + $0x30] sm:$0xff]
        %v506 = vld [vmem:[%s498 + $0x38] sm:$0xff]
        %v507 = vld [vmem:[%s498 + $0x40] sm:$0xff]
        %v508 = vld [vmem:[%s498 + $0x48] sm:$0xff]
        %v509 = vld [vmem:[%s498 + $0x50] sm:$0xff]
        %v510 = vld [vmem:[%s498 + $0x58] sm:$0xff]
        %v511 = vld [vmem:[%s498 + $0x60] sm:$0xff]
        %v512 = vld [vmem:[%s498 + $0x68] sm:$0xff]
        %v513 = vld [vmem:[%s498 + $0x70] sm:$0xff]
        %v514 = vld [vmem:[%s498 + $0x78] sm:$0xff]
        %v515 = vld [vmem:[#allocation7 + $0x3] sm:$0x1]
        %v516 = vmul.f32 %v515, 8.0
        %517 = vmatprep.subr.mxu0 0.0
        %518 = vmatpush1.msra.mxu0 %v514
        %519 = vmatprep.subr.mxu0 0.0
        %520 = vmatpush1.msra.mxu0 %v513
        %521 = vmatprep.subr.mxu0 0.0
        %522 = vmatpush1.msra.mxu0 %v512
        %523 = vmatprep.subr.mxu0 0.0
        %524 = vmatpush1.msra.mxu0 %v511
        %525 = vmatprep.subr.mxu0 0.0
        %526 = vmatpush1.msra.mxu0 %v510
        %527 = vmatprep.subr.mxu0 0.0
        %528 = vmatpush1.msra.mxu0 %v509
        %529 = vmatprep.subr.mxu0 0.0
        %530 = vmatpush1.msra.mxu0 %v508
        %531 = vmatprep.subr.mxu0 0.0
        %532 = vmatpush1.msra.mxu0 %v507
        %533 = vmatprep.subr.mxu0 0.0
        %534 = vmatpush1.msra.mxu0 %v506
        %535 = vmatprep.subr.mxu0 0.0
        %536 = vmatpush1.msra.mxu0 %v505
        %537 = vmatprep.subr.mxu0 0.0
        %538 = vmatpush1.msra.mxu0 %v504
        %539 = vmatprep.subr.mxu0 0.0
        %540 = vmatpush1.msra.mxu0 %v503
        %541 = vmatprep.subr.mxu0 0.0
        %542 = vmatpush1.msra.mxu0 %v502
        %543 = vmatprep.subr.mxu0 0.0
        %544 = vmatpush1.msra.mxu0 %v501
        %545 = vmatprep.subr.mxu0 0.0
        %546 = vmatpush1.msra.mxu0 %v500
        %547 = vmatprep.subr.mxu0 0.0
        %548 = vmatpush1.msra.mxu0 %v499
        %549 = vmatprep.subr.mxu0 0.0
        %550 = vmatpush2.msra.mxu0 0.0
        %551 = vmatprep.subr.mxu0 0.0
        %552 = vmatpush2.msra.mxu0 0.0
        %553 = vmatprep.subr.mxu0 0.0
        %554 = vmatpush2.msra.mxu0 0.0
        %555 = vmatprep.subr.mxu0 0.0
        %556 = vmatpush2.msra.mxu0 0.0
        %557 = vmatprep.subr.mxu0 0.0
        %558 = vmatpush2.msra.mxu0 0.0
        %559 = vmatprep.subr.mxu0 0.0
        %560 = vmatpush2.msra.mxu0 0.0
        %561 = vmatprep.subr.mxu0 0.0
        %562 = vmatpush2.msra.mxu0 0.0
        %563 = vmatprep.subr.mxu0 0.0
        %564 = vmatpush2.msra.mxu0 0.0
        %565 = vmatprep.subr.mxu0 0.0
        %566 = vmatpush2.msra.mxu0 0.0
        %567 = vmatprep.subr.mxu0 0.0
        %568 = vmatpush2.msra.mxu0 0.0
        %569 = vmatprep.subr.mxu0 0.0
        %570 = vmatpush2.msra.mxu0 0.0
        %571 = vmatprep.subr.mxu0 0.0
        %572 = vmatpush2.msra.mxu0 0.0
        %573 = vmatprep.subr.mxu0 0.0
        %574 = vmatpush2.msra.mxu0 0.0
        %575 = vmatprep.subr.mxu0 0.0
        %576 = vmatpush2.msra.mxu0 0.0
        %577 = vmatprep.subr.mxu0 0.0
        %578 = vmatpush2.msra.mxu0 0.0
        %579 = vmatprep.subr.mxu0 0.0
        %580 = vmatpush2.msra.mxu0 0.0
        %581 = vmatprep.mubr.f32.mxu0 0.0
        %582 = vmatmul.mubr.f32.gmra.mxu0 %v497
        %v583 = vpop.f32.mrf.mxu0
        %v584 = vadd.f32 %v516, %v583
        %v585 = vpop.f32.mrf.mxu0
        %586 = vdwg.mxu0
        %s587 = scalar_lea.vmem [#allocation5], 512
        %v588 = vld [vmem:[%s587] sm:$0xff]
        %v589 = vld [vmem:[%s587 + $0x8] sm:$0xff]
        %v590 = vld [vmem:[%s587 + $0x10] sm:$0xff]
        %v591 = vld [vmem:[%s587 + $0x18] sm:$0xff]
        %v592 = vld [vmem:[%s587 + $0x20] sm:$0xff]
        %v593 = vld [vmem:[%s587 + $0x28] sm:$0xff]
        %v594 = vld [vmem:[%s587 + $0x30] sm:$0xff]
        %v595 = vld [vmem:[%s587 + $0x38] sm:$0xff]
        %v596 = vld [vmem:[%s587 + $0x40] sm:$0xff]
        %v597 = vld [vmem:[%s587 + $0x48] sm:$0xff]
        %v598 = vld [vmem:[%s587 + $0x50] sm:$0xff]
        %v599 = vld [vmem:[%s587 + $0x58] sm:$0xff]
        %v600 = vld [vmem:[%s587 + $0x60] sm:$0xff]
        %v601 = vld [vmem:[%s587 + $0x68] sm:$0xff]
        %v602 = vld [vmem:[%s587 + $0x70] sm:$0xff]
        %v603 = vld [vmem:[%s587 + $0x78] sm:$0xff]
        %v604 = vld [vmem:[#allocation7 + $0x4] sm:$0x1]
        %605 = vmatprep.subr.mxu0 0.0
        %606 = vmatpush1.msra.mxu0 %v603
        %607 = vmatprep.subr.mxu0 0.0
        %608 = vmatpush1.msra.mxu0 %v602
        %609 = vmatprep.subr.mxu0 0.0
        %610 = vmatpush1.msra.mxu0 %v601
        %611 = vmatprep.subr.mxu0 0.0
        %612 = vmatpush1.msra.mxu0 %v600
        %613 = vmatprep.subr.mxu0 0.0
        %614 = vmatpush1.msra.mxu0 %v599
        %615 = vmatprep.subr.mxu0 0.0
        %616 = vmatpush1.msra.mxu0 %v598
        %617 = vmatprep.subr.mxu0 0.0
        %618 = vmatpush1.msra.mxu0 %v597
        %619 = vmatprep.subr.mxu0 0.0
        %620 = vmatpush1.msra.mxu0 %v596
        %621 = vmatprep.subr.mxu0 0.0
        %622 = vmatpush1.msra.mxu0 %v595
        %623 = vmatprep.subr.mxu0 0.0
        %624 = vmatpush1.msra.mxu0 %v594
        %625 = vmatprep.subr.mxu0 0.0
        %626 = vmatpush1.msra.mxu0 %v593
        %627 = vmatprep.subr.mxu0 0.0
        %628 = vmatpush1.msra.mxu0 %v592
        %629 = vmatprep.subr.mxu0 0.0
        %630 = vmatpush1.msra.mxu0 %v591
        %631 = vmatprep.subr.mxu0 0.0
        %632 = vmatpush1.msra.mxu0 %v590
        %633 = vmatprep.subr.mxu0 0.0
        %634 = vmatpush1.msra.mxu0 %v589
        %635 = vmatprep.subr.mxu0 0.0
        %636 = vmatpush1.msra.mxu0 %v588
        %637 = vmatprep.subr.mxu0 0.0
        %638 = vmatpush2.msra.mxu0 0.0
        %639 = vmatprep.subr.mxu0 0.0
        %640 = vmatpush2.msra.mxu0 0.0
        %641 = vmatprep.subr.mxu0 0.0
        %642 = vmatpush2.msra.mxu0 0.0
        %643 = vmatprep.subr.mxu0 0.0
        %644 = vmatpush2.msra.mxu0 0.0
        %645 = vmatprep.subr.mxu0 0.0
        %646 = vmatpush2.msra.mxu0 0.0
        %647 = vmatprep.subr.mxu0 0.0
        %648 = vmatpush2.msra.mxu0 0.0
        %649 = vmatprep.subr.mxu0 0.0
        %650 = vmatpush2.msra.mxu0 0.0
        %651 = vmatprep.subr.mxu0 0.0
        %652 = vmatpush2.msra.mxu0 0.0
        %653 = vmatprep.subr.mxu0 0.0
        %654 = vmatpush2.msra.mxu0 0.0
        %655 = vmatprep.subr.mxu0 0.0
        %656 = vmatpush2.msra.mxu0 0.0
        %657 = vmatprep.subr.mxu0 0.0
        %658 = vmatpush2.msra.mxu0 0.0
        %659 = vmatprep.subr.mxu0 0.0
        %660 = vmatpush2.msra.mxu0 0.0
        %661 = vmatprep.subr.mxu0 0.0
        %662 = vmatpush2.msra.mxu0 0.0
        %663 = vmatprep.subr.mxu0 0.0
        %664 = vmatpush2.msra.mxu0 0.0
        %665 = vmatprep.subr.mxu0 0.0
        %666 = vmatpush2.msra.mxu0 0.0
        %667 = vmatprep.subr.mxu0 0.0
        %668 = vmatpush2.msra.mxu0 0.0
        %669 = vmatprep.mubr.f32.mxu0 0.0
        %670 = vmatmul.mubr.f32.gmra.mxu0 %v584
        %v671 = vpop.f32.mrf.mxu0
        %v672 = vadd.f32 %v604, %v671
        %v673 = vpop.f32.mrf.mxu0
        %674 = vdwg.mxu0
        %v675 = vmax.f32 %v672, 0.0
        %s676 = scalar_lea.vmem [#allocation5], 640
        %v677 = vld [vmem:[%s676] sm:$0xff]
        %v678 = vld [vmem:[%s676 + $0x8] sm:$0xff]
        %v679 = vld [vmem:[%s676 + $0x10] sm:$0xff]
        %v680 = vld [vmem:[%s676 + $0x18] sm:$0xff]
        %v681 = vld [vmem:[%s676 + $0x20] sm:$0xff]
        %v682 = vld [vmem:[%s676 + $0x28] sm:$0xff]
        %v683 = vld [vmem:[%s676 + $0x30] sm:$0xff]
        %v684 = vld [vmem:[%s676 + $0x38] sm:$0xff]
        %v685 = vld [vmem:[%s676 + $0x40] sm:$0xff]
        %v686 = vld [vmem:[%s676 + $0x48] sm:$0xff]
        %v687 = vld [vmem:[%s676 + $0x50] sm:$0xff]
        %v688 = vld [vmem:[%s676 + $0x58] sm:$0xff]
        %v689 = vld [vmem:[%s676 + $0x60] sm:$0xff]
        %v690 = vld [vmem:[%s676 + $0x68] sm:$0xff]
        %v691 = vld [vmem:[%s676 + $0x70] sm:$0xff]
        %v692 = vld [vmem:[%s676 + $0x78] sm:$0xff]
        %v693 = vld [vmem:[#allocation7 + $0x5] sm:$0x1]
        %694 = vmatprep.subr.mxu0 0.0
        %695 = vmatpush1.msra.mxu0 %v692
        %696 = vmatprep.subr.mxu0 0.0
        %697 = vmatpush1.msra.mxu0 %v691
        %698 = vmatprep.subr.mxu0 0.0
        %699 = vmatpush1.msra.mxu0 %v690
        %700 = vmatprep.subr.mxu0 0.0
        %701 = vmatpush1.msra.mxu0 %v689
        %702 = vmatprep.subr.mxu0 0.0
        %703 = vmatpush1.msra.mxu0 %v688
        %704 = vmatprep.subr.mxu0 0.0
        %705 = vmatpush1.msra.mxu0 %v687
        %706 = vmatprep.subr.mxu0 0.0
        %707 = vmatpush1.msra.mxu0 %v686
        %708 = vmatprep.subr.mxu0 0.0
        %709 = vmatpush1.msra.mxu0 %v685
        %710 = vmatprep.subr.mxu0 0.0
        %711 = vmatpush1.msra.mxu0 %v684
        %712 = vmatprep.subr.mxu0 0.0
        %713 = vmatpush1.msra.mxu0 %v683
        %714 = vmatprep.subr.mxu0 0.0
        %715 = vmatpush1.msra.mxu0 %v682
        %716 = vmatprep.subr.mxu0 0.0
        %717 = vmatpush1.msra.mxu0 %v681
        %718 = vmatprep.subr.mxu0 0.0
        %719 = vmatpush1.msra.mxu0 %v680
        %720 = vmatprep.subr.mxu0 0.0
        %721 = vmatpush1.msra.mxu0 %v679
        %722 = vmatprep.subr.mxu0 0.0
        %723 = vmatpush1.msra.mxu0 %v678
        %724 = vmatprep.subr.mxu0 0.0
        %725 = vmatpush1.msra.mxu0 %v677
        %726 = vmatprep.subr.mxu0 0.0
        %727 = vmatpush2.msra.mxu0 0.0
        %728 = vmatprep.subr.mxu0 0.0
        %729 = vmatpush2.msra.mxu0 0.0
        %730 = vmatprep.subr.mxu0 0.0
        %731 = vmatpush2.msra.mxu0 0.0
        %732 = vmatprep.subr.mxu0 0.0
        %733 = vmatpush2.msra.mxu0 0.0
        %734 = vmatprep.subr.mxu0 0.0
        %735 = vmatpush2.msra.mxu0 0.0
        %736 = vmatprep.subr.mxu0 0.0
        %737 = vmatpush2.msra.mxu0 0.0
        %738 = vmatprep.subr.mxu0 0.0
        %739 = vmatpush2.msra.mxu0 0.0
        %740 = vmatprep.subr.mxu0 0.0
        %741 = vmatpush2.msra.mxu0 0.0
        %742 = vmatprep.subr.mxu0 0.0
        %743 = vmatpush2.msra.mxu0 0.0
        %744 = vmatprep.subr.mxu0 0.0
        %745 = vmatpush2.msra.mxu0 0.0
        %746 = vmatprep.subr.mxu0 0.0
        %747 = vmatpush2.msra.mxu0 0.0
        %748 = vmatprep.subr.mxu0 0.0
        %749 = vmatpush2.msra.mxu0 0.0
        %750 = vmatprep.subr.mxu0 0.0
        %751 = vmatpush2.msra.mxu0 0.0
        %752 = vmatprep.subr.mxu0 0.0
        %753 = vmatpush2.msra.mxu0 0.0
        %754 = vmatprep.subr.mxu0 0.0
        %755 = vmatpush2.msra.mxu0 0.0
        %756 = vmatprep.subr.mxu0 0.0
        %757 = vmatpush2.msra.mxu0 0.0
        %758 = vmatprep.mubr.f32.mxu0 0.0
        %759 = vmatmul.mubr.f32.gmra.mxu0 %v675
        %v760 = vpop.f32.mrf.mxu0
        %v761 = vadd.f32 %v693, %v760
        %v762 = vpop.f32.mrf.mxu0
        %763 = vdwg.mxu0
        %v764 = vmax.f32 %v761, 0.0
        %s765 = scalar_lea.vmem [#allocation5], 768
        %v766 = vld [vmem:[%s765] sm:$0xff]
        %v767 = vld [vmem:[%s765 + $0x8] sm:$0xff]
        %v768 = vld [vmem:[%s765 + $0x10] sm:$0xff]
        %v769 = vld [vmem:[%s765 + $0x18] sm:$0xff]
        %v770 = vld [vmem:[%s765 + $0x20] sm:$0xff]
        %v771 = vld [vmem:[%s765 + $0x28] sm:$0xff]
        %v772 = vld [vmem:[%s765 + $0x30] sm:$0xff]
        %v773 = vld [vmem:[%s765 + $0x38] sm:$0xff]
        %v774 = vld [vmem:[%s765 + $0x40] sm:$0xff]
        %v775 = vld [vmem:[%s765 + $0x48] sm:$0xff]
        %v776 = vld [vmem:[%s765 + $0x50] sm:$0xff]
        %v777 = vld [vmem:[%s765 + $0x58] sm:$0xff]
        %v778 = vld [vmem:[%s765 + $0x60] sm:$0xff]
        %v779 = vld [vmem:[%s765 + $0x68] sm:$0xff]
        %v780 = vld [vmem:[%s765 + $0x70] sm:$0xff]
        %v781 = vld [vmem:[%s765 + $0x78] sm:$0xff]
        %v782 = vld [vmem:[#allocation7 + $0x6] sm:$0x1]
        %783 = vmatprep.subr.mxu0 0.0
        %784 = vmatpush1.msra.mxu0 %v781
        %785 = vmatprep.subr.mxu0 0.0
        %786 = vmatpush1.msra.mxu0 %v780
        %787 = vmatprep.subr.mxu0 0.0
        %788 = vmatpush1.msra.mxu0 %v779
        %789 = vmatprep.subr.mxu0 0.0
        %790 = vmatpush1.msra.mxu0 %v778
        %791 = vmatprep.subr.mxu0 0.0
        %792 = vmatpush1.msra.mxu0 %v777
        %793 = vmatprep.subr.mxu0 0.0
        %794 = vmatpush1.msra.mxu0 %v776
        %795 = vmatprep.subr.mxu0 0.0
        %796 = vmatpush1.msra.mxu0 %v775
        %797 = vmatprep.subr.mxu0 0.0
        %798 = vmatpush1.msra.mxu0 %v774
        %799 = vmatprep.subr.mxu0 0.0
        %800 = vmatpush1.msra.mxu0 %v773
        %801 = vmatprep.subr.mxu0 0.0
        %802 = vmatpush1.msra.mxu0 %v772
        %803 = vmatprep.subr.mxu0 0.0
        %804 = vmatpush1.msra.mxu0 %v771
        %805 = vmatprep.subr.mxu0 0.0
        %806 = vmatpush1.msra.mxu0 %v770
        %807 = vmatprep.subr.mxu0 0.0
        %808 = vmatpush1.msra.mxu0 %v769
        %809 = vmatprep.subr.mxu0 0.0
        %810 = vmatpush1.msra.mxu0 %v768
        %811 = vmatprep.subr.mxu0 0.0
        %812 = vmatpush1.msra.mxu0 %v767
        %813 = vmatprep.subr.mxu0 0.0
        %814 = vmatpush1.msra.mxu0 %v766
        %815 = vmatprep.subr.mxu0 0.0
        %816 = vmatpush2.msra.mxu0 0.0
        %817 = vmatprep.subr.mxu0 0.0
        %818 = vmatpush2.msra.mxu0 0.0
        %819 = vmatprep.subr.mxu0 0.0
        %820 = vmatpush2.msra.mxu0 0.0
        %821 = vmatprep.subr.mxu0 0.0
        %822 = vmatpush2.msra.mxu0 0.0
        %823 = vmatprep.subr.mxu0 0.0
        %824 = vmatpush2.msra.mxu0 0.0
        %825 = vmatprep.subr.mxu0 0.0
        %826 = vmatpush2.msra.mxu0 0.0
        %827 = vmatprep.subr.mxu0 0.0
        %828 = vmatpush2.msra.mxu0 0.0
        %829 = vmatprep.subr.mxu0 0.0
        %830 = vmatpush2.msra.mxu0 0.0
        %831 = vmatprep.subr.mxu0 0.0
        %832 = vmatpush2.msra.mxu0 0.0
        %833 = vmatprep.subr.mxu0 0.0
        %834 = vmatpush2.msra.mxu0 0.0
        %835 = vmatprep.subr.mxu0 0.0
        %836 = vmatpush2.msra.mxu0 0.0
        %837 = vmatprep.subr.mxu0 0.0
        %838 = vmatpush2.msra.mxu0 0.0
        %839 = vmatprep.subr.mxu0 0.0
        %840 = vmatpush2.msra.mxu0 0.0
        %841 = vmatprep.subr.mxu0 0.0
        %842 = vmatpush2.msra.mxu0 0.0
        %843 = vmatprep.subr.mxu0 0.0
        %844 = vmatpush2.msra.mxu0 0.0
        %845 = vmatprep.subr.mxu0 0.0
        %846 = vmatpush2.msra.mxu0 0.0
        %847 = vmatprep.mubr.f32.mxu0 0.0
        %848 = vmatmul.mubr.f32.gmra.mxu0 %v764
        %v849 = vpop.f32.mrf.mxu0
        %v850 = vadd.f32 %v782, %v849
        %v851 = vpop.f32.mrf.mxu0
        %852 = vdwg.mxu0
        %v853 = vmax.f32 %v850, 0.0
        %s854 = scalar_lea.vmem [#allocation5], 896
        %v855 = vld [vmem:[%s854] sm:$0xff]
        %v856 = vld [vmem:[%s854 + $0x8] sm:$0xff]
        %v857 = vld [vmem:[%s854 + $0x10] sm:$0xff]
        %v858 = vld [vmem:[%s854 + $0x18] sm:$0xff]
        %v859 = vld [vmem:[%s854 + $0x20] sm:$0xff]
        %v860 = vld [vmem:[%s854 + $0x28] sm:$0xff]
        %v861 = vld [vmem:[%s854 + $0x30] sm:$0xff]
        %v862 = vld [vmem:[%s854 + $0x38] sm:$0xff]
        %v863 = vld [vmem:[%s854 + $0x40] sm:$0xff]
        %v864 = vld [vmem:[%s854 + $0x48] sm:$0xff]
        %v865 = vld [vmem:[%s854 + $0x50] sm:$0xff]
        %v866 = vld [vmem:[%s854 + $0x58] sm:$0xff]
        %v867 = vld [vmem:[%s854 + $0x60] sm:$0xff]
        %v868 = vld [vmem:[%s854 + $0x68] sm:$0xff]
        %v869 = vld [vmem:[%s854 + $0x70] sm:$0xff]
        %v870 = vld [vmem:[%s854 + $0x78] sm:$0xff]
        %v871 = vld [vmem:[#allocation7 + $0x7] sm:$0x1]
        %872 = vmatprep.subr.mxu0 0.0
        %873 = vmatpush1.msra.mxu0 %v870
        %874 = vmatprep.subr.mxu0 0.0
        %875 = vmatpush1.msra.mxu0 %v869
        %876 = vmatprep.subr.mxu0 0.0
        %877 = vmatpush1.msra.mxu0 %v868
        %878 = vmatprep.subr.mxu0 0.0
        %879 = vmatpush1.msra.mxu0 %v867
        %880 = vmatprep.subr.mxu0 0.0
        %881 = vmatpush1.msra.mxu0 %v866
        %882 = vmatprep.subr.mxu0 0.0
        %883 = vmatpush1.msra.mxu0 %v865
        %884 = vmatprep.subr.mxu0 0.0
        %885 = vmatpush1.msra.mxu0 %v864
        %886 = vmatprep.subr.mxu0 0.0
        %887 = vmatpush1.msra.mxu0 %v863
        %888 = vmatprep.subr.mxu0 0.0
        %889 = vmatpush1.msra.mxu0 %v862
        %890 = vmatprep.subr.mxu0 0.0
        %891 = vmatpush1.msra.mxu0 %v861
        %892 = vmatprep.subr.mxu0 0.0
        %893 = vmatpush1.msra.mxu0 %v860
        %894 = vmatprep.subr.mxu0 0.0
        %895 = vmatpush1.msra.mxu0 %v859
        %896 = vmatprep.subr.mxu0 0.0
        %897 = vmatpush1.msra.mxu0 %v858
        %898 = vmatprep.subr.mxu0 0.0
        %899 = vmatpush1.msra.mxu0 %v857
        %900 = vmatprep.subr.mxu0 0.0
        %901 = vmatpush1.msra.mxu0 %v856
        %902 = vmatprep.subr.mxu0 0.0
        %903 = vmatpush1.msra.mxu0 %v855
        %904 = vmatprep.subr.mxu0 0.0
        %905 = vmatpush2.msra.mxu0 0.0
        %906 = vmatprep.subr.mxu0 0.0
        %907 = vmatpush2.msra.mxu0 0.0
        %908 = vmatprep.subr.mxu0 0.0
        %909 = vmatpush2.msra.mxu0 0.0
        %910 = vmatprep.subr.mxu0 0.0
        %911 = vmatpush2.msra.mxu0 0.0
        %912 = vmatprep.subr.mxu0 0.0
        %913 = vmatpush2.msra.mxu0 0.0
        %914 = vmatprep.subr.mxu0 0.0
        %915 = vmatpush2.msra.mxu0 0.0
        %916 = vmatprep.subr.mxu0 0.0
        %917 = vmatpush2.msra.mxu0 0.0
        %918 = vmatprep.subr.mxu0 0.0
        %919 = vmatpush2.msra.mxu0 0.0
        %920 = vmatprep.subr.mxu0 0.0
        %921 = vmatpush2.msra.mxu0 0.0
        %922 = vmatprep.subr.mxu0 0.0
        %923 = vmatpush2.msra.mxu0 0.0
        %924 = vmatprep.subr.mxu0 0.0
        %925 = vmatpush2.msra.mxu0 0.0
        %926 = vmatprep.subr.mxu0 0.0
        %927 = vmatpush2.msra.mxu0 0.0
        %928 = vmatprep.subr.mxu0 0.0
        %929 = vmatpush2.msra.mxu0 0.0
        %930 = vmatprep.subr.mxu0 0.0
        %931 = vmatpush2.msra.mxu0 0.0
        %932 = vmatprep.subr.mxu0 0.0
        %933 = vmatpush2.msra.mxu0 0.0
        %934 = vmatprep.subr.mxu0 0.0
        %935 = vmatpush2.msra.mxu0 0.0
        %936 = vmatprep.mubr.f32.mxu0 0.0
        %937 = vmatmul.mubr.f32.gmra.mxu0 %v853
        %v938 = vpop.f32.mrf.mxu0
        %v939 = vadd.f32 %v871, %v938
        %v940 = vpop.f32.mrf.mxu0
        %941 = vdwg.mxu0
        %v942 = vlaneseq
        %v943 = vand.u32 %v942, 127
        %v944 = vmax.f32 %v939, -8.0
        %vm945 = vcmp.ge.s32.totalorder %v943, 5
        %v946 = vsel %vm945, %v944, %v939
        %v947 = vlaneseq
        %v948 = vshrl.u32 %v947, 7
        %v949 = vsub.s32 0, %v948
        %v950 = vrot.slane %v946, %v949
        %951 = vst [vmem:[%s212] sm:$0xff] %v950
        %s952 = sand.u32 %s97, 1
        %s953 = scalar_lea.sflag [#allocation4], %s952
        %s954 = sand.u32 %s97, 1
        %s955 = smul.addr %s954, 8
        %s956 = scalar_lea.vmem [#allocation8], %s955
        // Predicated region
        $region45: #{tpu_custom_call.1} parent=31 // pred_check
          %p957 = pneg %p107
        $region46: #{tpu_custom_call.1} parent=31 // pred_check_branch
          %959 = sbr.rel (%p957) target = $region48
        $region47: #{tpu_custom_call.1} parent=31 // pred_region
          %s961 = ssub.s32 128, 128
          %962 = vsyncadd %s953, %s961
          %s963 = smul.addr %s21, 128
          %s964 = scalar_lea.hbm %s3, %s963
          %s966 = sshll.u32 %s956, 4
          %s967 = int_to_ptr.vmem [resolvable:$true] %s966
          %969 = dma.vmem_to_hbm [thread:$0]  %s967, 128, %s964, %s953
        $region48: #{tpu_custom_call.1} parent=31 // pred_fallthru
          _
      $region32: #{tpu_custom_call.1} parent=5 // pred_fallthru
        _
      %p970 = scmp.le.s32.totalorder 2, %s16
      // Predicated region
      $region49: #{tpu_custom_call.1} parent=5 // pred_check
        %p971 = pneg %p970
      $region50: #{tpu_custom_call.1} parent=5 // pred_check_branch
        %973 = sbr.rel (%p971) target = $region52
      $region51: #{tpu_custom_call.1} parent=5 // pred_region
        %s974 = ssub.s32 %s16, 2
        // Predicated region
        $region53: #{tpu_custom_call.1} parent=51 // pred_check
          %p975 = pneg %p113
        $region54: #{tpu_custom_call.1} parent=51 // pred_check_branch
          %977 = sbr.rel (%p975) target = $region56
        $region55: #{tpu_custom_call.1} parent=51 // pred_region
          %s978 = sand.u32 %s98, 1
          %s979 = scalar_lea.sflag [#allocation4], %s978
          %s980 = sand.u32 %s98, 1
          %s981 = smul.addr %s980, 8
          %s982 = scalar_lea.vmem [#allocation8], %s981
          %983 = dma.done %s979, 128
        $region56: #{tpu_custom_call.1} parent=51 // pred_fallthru
          _
      $region52: #{tpu_custom_call.1} parent=5 // pred_fallthru
        _
    $region6: #{tpu_custom_call.1} parent=1 // loop_footer
      %s20 = sadd.s32 1, %s16
    $region7: #{tpu_custom_call.1} parent=1 // loop_footer_branch
      %15 = sbr.rel target = $region3
    $region8: #{tpu_custom_call.1} parent=1 // loop_exit
      _
    %984 = vsyncpa [#allocation3], 1
    %s985 = scalar_lea.sflag [#allocation3], 1
    %986 = vsyncpa %s985, 1
    %987 = vsyncpa [#allocation6], 1
    %988 = vsyncpa [#allocation4], 1
    %s989 = scalar_lea.sflag [#allocation4], 1
    %990 = vsyncpa %s989, 1

</llo_original>
